<compile_context>
chip_gen: v6e
topology: v6e:2x2x1
jax: 0.10.0
libtpu: 0.0.40
codegen_flags: <defaults>
</compile_context>

<pallas_src>
import jax
import jax.numpy as jnp
from jax.experimental import pallas as pl
from jax.experimental.pallas import tpu as pltpu

BATCH = 64          # hard-coded by the PyTorch forward (x.view(64, -1))
INPUT_DIM = 128     # 1 * 8 * 16
HIDDEN_DIM = 32
OUTPUT_DIM = 10
LAYER_DIM = 1       # single-layer LSTM
GATE_PAD = 128      # each gate padded to a full 128-lane vreg block
NUM_GATES = 4
GATES_W = NUM_GATES * GATE_PAD   # 512


def _lstm_step_kernel(x_ref, state_ref, w_ref, wout_ref, b_ref,
                      val_ref, state_out_ref):
    """One LSTM step + Linear + log_softmax(dim=0); everything lane-dense in VMEM.

    x_ref:         (B, 128)       f32   flattened image batch
    state_ref:     (2, B, 128)    f32   [h0 | c0], lane-padded (zeros past H)
    w_ref:         (2, 128, 512)  bf16  [0]=W_ih^T, [1]=W_hh^T (rows>=H zero),
                                        each gate in its own 128-lane block
    wout_ref:      (128, 128)     bf16  Linear weight^T padded (valid [:H,:O])
    b_ref:         (1, 640)       f32   [b_ih+b_hh (512) | b_out (128)]
    val_ref:       (B, 128)       f32   log_softmax(logits), valid lanes [0,O)
    state_out_ref: (2, B, 128)    f32   [h1 | c1] padded (aliased onto state_ref)
    """
    # bf16 casts in-kernel (MXU operand transport); f32 accumulation.
    x_bf = x_ref[...].astype(jnp.bfloat16)             # (B, 128)
    h0 = state_ref[0, :, :]                            # (B, 128) f32
    c0 = state_ref[1, :, :]                            # (B, 128) f32
    h0_bf = h0.astype(jnp.bfloat16)

    b_gates = b_ref[:, :GATES_W]                        # (1, 512)
    b_out = b_ref[:, GATES_W:GATES_W + GATE_PAD]        # (1, 128)

    # Two aligned K=128 MXU passes; padded rows of W_hh^T are zero so the
    # padded h0 lanes contribute exactly nothing.
    gates = (jnp.dot(x_bf, w_ref[0], preferred_element_type=jnp.float32)
             + jnp.dot(h0_bf, w_ref[1], preferred_element_type=jnp.float32)
             + b_gates)                                 # (B, 512) f32

    G = GATE_PAD
    # Each slice is a full 128-lane vreg block: no lane shuffles.
    # PyTorch LSTM gate ordering: input, forget, cell(g), output.
    i_g = jax.nn.sigmoid(gates[:, 0 * G:1 * G])
    f_g = jax.nn.sigmoid(gates[:, 1 * G:2 * G])
    g_g = jnp.tanh(gates[:, 2 * G:3 * G])
    o_g = jax.nn.sigmoid(gates[:, 3 * G:4 * G])

    # State update in f32 on full-width vregs; pad lanes stay exactly 0
    # (0.5 * 0 + 0.5 * tanh(0) = 0).
    c1 = f_g * c0 + i_g * g_g                           # (B, 128)
    h1 = o_g * jnp.tanh(c1)                             # (B, 128)

    # Output layer (bf16 operands, f32 accumulation). Padded rows/cols of
    # wout/b_out are zero, so pad lanes of logits are exactly 0.
    logits = jnp.dot(h1.astype(jnp.bfloat16), wout_ref[...],
                     preferred_element_type=jnp.float32) + b_out   # (B, 128)

    # F.log_softmax with implicit dim on a (64, 1, 10) tensor -> dim=0 (batch).
    m = jnp.max(logits, axis=0, keepdims=True)
    shifted = logits - m
    lse = jnp.log(jnp.sum(jnp.exp(shifted), axis=0, keepdims=True))

    # Lane-dense full-vreg stores only.
    val_ref[...] = shifted - lse
    state_out_ref[0, :, :] = h1
    state_out_ref[1, :, :] = c1


_COST = pl.CostEstimate(
    flops=2 * BATCH * GATE_PAD * GATES_W * 2 + 2 * BATCH * GATE_PAD * GATE_PAD,
    transcendentals=6 * BATCH * GATE_PAD,
    bytes_accessed=(BATCH * GATE_PAD * 4                # x
                    + 2 * (2 * BATCH * GATE_PAD * 4)    # state in + out
                    + 2 * GATE_PAD * GATES_W * 2        # gate weights (bf16)
                    + GATE_PAD * GATE_PAD * 2           # out weights  (bf16)
                    + (GATES_W + GATE_PAD) * 4          # biases
                    + BATCH * GATE_PAD * 4))            # val


def _lstm_step(x2, state, params):
    """Pallas call: (64,128) f32 x, (2,64,128) f32 padded state -> (val, state')."""
    vmem = pl.BlockSpec(memory_space=pltpu.MemorySpace.VMEM)
    return pl.pallas_call(
        _lstm_step_kernel,
        out_shape=(jax.ShapeDtypeStruct((BATCH, GATE_PAD), jnp.float32),
                   jax.ShapeDtypeStruct((2, BATCH, GATE_PAD), jnp.float32)),
        in_specs=[vmem] * 5,
        out_specs=(vmem, vmem),
        input_output_aliases={1: 1},   # state buffer updated in place
        cost_estimate=_COST,
    )(x2, state, params["w_gates"], params["w_out"], params["b_all"])


def pack_state(hidden_state):
    """(h0, c0) each (1, B, H) -> one padded (2, B, 128) f32 state slab."""
    h0, c0 = hidden_state
    pad = ((0, 0), (0, GATE_PAD - HIDDEN_DIM))
    return jnp.stack([jnp.pad(h0[0].astype(jnp.float32), pad),
                      jnp.pad(c0[0].astype(jnp.float32), pad)], axis=0)


def unpack_state(state):
    """Padded (2, B, 128) state -> (h, c) each (1, B, H)."""
    return state[0, :, :HIDDEN_DIM][None, ...], state[1, :, :HIDDEN_DIM][None, ...]


@jax.jit
def rnn_forward_packed(x, state, params):
    """State-resident step: keep h/c in the padded layout across calls.

    Returns (val_padded (64,128) f32, new_state (2,64,128) f32).
    In a real recurrent driver, also pass donate_argnums=(1,) to jit so the
    pallas-level aliasing makes the state update fully in place.
    """
    x2 = x.reshape(BATCH, -1).astype(jnp.float32)      # x.view(64, -1)
    return _lstm_step(x2, state, params)


@jax.jit
def rnn_forward(x, hidden_state, params):
    """Mirrors RNN.forward(x, hidden_state) -> (val, (h1, c1))."""
    x2 = x.reshape(BATCH, -1).astype(jnp.float32)      # x.view(64, -1)
    state = pack_state(hidden_state)
    val_pad, new_state = _lstm_step(x2, state, params)
    val = val_pad[:, :OUTPUT_DIM].reshape(BATCH, 1, OUTPUT_DIM)
    return val, unpack_state(new_state)


def _pad_gate_cols(m):
    """(K, 4*H) gate-major -> (K, 4*128): each gate in its own 128-lane block."""
    blocks = []
    for g in range(NUM_GATES):
        blk = m[:, g * HIDDEN_DIM:(g + 1) * HIDDEN_DIM]
        blocks.append(jnp.pad(blk, ((0, 0), (0, GATE_PAD - HIDDEN_DIM))))
    return jnp.concatenate(blocks, axis=1)


def init_params(key):
    """nn.LSTM / nn.Linear shaped params, pre-packed for the kernel.

    nn.LSTM(I, H, 1): weight_ih_l0 (4H, I), weight_hh_l0 (4H, H), biases (4H,)
    nn.Linear(H, O):  weight (O, H), bias (O,)
    Returns (packed_params, raw_params). `raw_params` feed the pure-jnp reference.
    All pad rows / pad columns in the packed params are EXACTLY zero by
    construction (required: the padded h/c state is reused across steps).
    """
    ks = jax.random.split(key, 6)
    k = 1.0 / jnp.sqrt(HIDDEN_DIM)

    w_ih = jax.random.uniform(ks[0], (4 * HIDDEN_DIM, INPUT_DIM), jnp.float32, -k, k)
    w_hh = jax.random.uniform(ks[1], (4 * HIDDEN_DIM, HIDDEN_DIM), jnp.float32, -k, k)
    b_ih = jax.random.uniform(ks[2], (4 * HIDDEN_DIM,), jnp.float32, -k, k)
    b_hh = jax.random.uniform(ks[3], (4 * HIDDEN_DIM,), jnp.float32, -k, k)
    w_out = jax.random.uniform(ks[4], (OUTPUT_DIM, HIDDEN_DIM), jnp.float32, -k, k)
    b_out = jax.random.uniform(ks[5], (OUTPUT_DIM,), jnp.float32, -k, k)

    # (2, 128, 512): [0] = W_ih^T, [1] = W_hh^T with zero rows past HIDDEN_DIM.
    w_x = _pad_gate_cols(w_ih.T)                                       # (128, 512)
    w_h = jnp.pad(_pad_gate_cols(w_hh.T),
                  ((0, GATE_PAD - HIDDEN_DIM), (0, 0)))                # (128, 512)
    w_gates = jnp.stack([w_x, w_h], axis=0)                            # (2, 128, 512)

    b_gates = _pad_gate_cols((b_ih + b_hh)[None, :])                   # (1, 512)
    b_out_p = jnp.zeros((1, GATE_PAD), jnp.float32).at[0, :OUTPUT_DIM].set(b_out)
    b_all = jnp.concatenate([b_gates, b_out_p], axis=1)                # (1, 640)

    w_out_p = jnp.zeros((GATE_PAD, GATE_PAD), jnp.float32)
    w_out_p = w_out_p.at[:HIDDEN_DIM, :OUTPUT_DIM].set(w_out.T)        # (128, 128)

    packed = {
        "w_gates": w_gates.astype(jnp.bfloat16),   # bf16 MXU operand transport
        "w_out": w_out_p.astype(jnp.bfloat16),
        "b_all": b_all,                            # f32 (added after accumulation)
    }
    raw = {"w_ih": w_ih, "w_hh": w_hh, "b_ih": b_ih, "b_hh": b_hh,
           "w_out": w_out, "b_out": b_out}
    return packed, raw


def rnn_forward_ref(x, hidden_state, raw):
    """Pure-jnp f32 reference of the exact PyTorch forward semantics."""
    h0, c0 = hidden_state
    x2 = x.reshape(BATCH, -1)
    gates = (x2 @ raw["w_ih"].T + h0[0] @ raw["w_hh"].T
             + raw["b_ih"] + raw["b_hh"])
    H = HIDDEN_DIM
    i_g = jax.nn.sigmoid(gates[:, 0 * H:1 * H])
    f_g = jax.nn.sigmoid(gates[:, 1 * H:2 * H])
    g_g = jnp.tanh(gates[:, 2 * H:3 * H])
    o_g = jax.nn.sigmoid(gates[:, 3 * H:4 * H])
    c1 = f_g * c0[0] + i_g * g_g
    h1 = o_g * jnp.tanh(c1)
    logits = h1 @ raw["w_out"].T + raw["b_out"]
    val = jax.nn.log_softmax(logits, axis=0).reshape(BATCH, 1, OUTPUT_DIM)
    return val, (h1[None, ...], c1[None, ...])


if __name__ == "__main__":
    key = jax.random.PRNGKey(0)
    k_x, k_h, k_c, k_p = jax.random.split(key, 4)

    # x: NCHW image batch, flattens to (64, 128) just like MNIST -> view(64, -1)
    x = jax.random.normal(k_x, (BATCH, 1, 8, 16), dtype=jnp.float32)
    h0 = jax.random.normal(k_h, (LAYER_DIM, BATCH, HIDDEN_DIM), dtype=jnp.float32)
    c0 = jax.random.normal(k_c, (LAYER_DIM, BATCH, HIDDEN_DIM), dtype=jnp.float32)

    params, raw = init_params(k_p)

    # --- PyTorch-mirror single forward ------------------------------------
    val, (h1, c1) = rnn_forward(x, (h0, c0), params)
    jax.block_until_ready((val, h1, c1))

    assert val.shape == (BATCH, 1, OUTPUT_DIM)
    assert h1.shape == (LAYER_DIM, BATCH, HIDDEN_DIM)
    assert c1.shape == (LAYER_DIM, BATCH, HIDDEN_DIM)

    # log_softmax over dim=0: exp should sum to 1 along the batch axis.
    assert jnp.allclose(jnp.exp(val).sum(axis=0), 1.0, atol=1e-3)

    # Compare against a pure-jnp f32 reference (kernel uses bf16 matmul
    # operands with f32 accumulation -> loose tolerance).
    val_r, (h1_r, c1_r) = rnn_forward_ref(x, (h0, c0), raw)
    assert float(jnp.max(jnp.abs(val - val_r))) < 2e-1
    assert float(jnp.max(jnp.abs(h1 - h1_r))) < 1e-1
    assert float(jnp.max(jnp.abs(c1 - c1_r))) < 1e-1

    # --- State-resident recurrent path (padded state reused across steps) --
    state = pack_state((h0, c0))
    ref_h, ref_c = h0, c0
    for t in range(3):
        xt = jax.random.normal(jax.random.fold_in(k_x, t),
                               (BATCH, 1, 8, 16), dtype=jnp.float32)
        val_pad, state = rnn_forward_packed(xt, state, params)
        val_rt, (ref_h, ref_c) = rnn_forward_ref(xt, (ref_h, ref_c), raw)
        v = val_pad[:, :OUTPUT_DIM].reshape(BATCH, 1, OUTPUT_DIM)
        assert float(jnp.max(jnp.abs(v - val_rt))) < 2e-1
    h_fin, c_fin = unpack_state(state)
    jax.block_until_ready((h_fin, c_fin))
    assert float(jnp.max(jnp.abs(h_fin - ref_h))) < 1e-1
    assert float(jnp.max(jnp.abs(c_fin - ref_c))) < 1e-1

    print("KERNEL_OK")
</pallas_src>

<mosaic_0001>
module attributes {stable_mosaic.version = 11 : i64} {
  func.func @_lstm_step_kernel(%arg0: memref<64x128xf32, #tpu.memory_space<vmem>>, %arg1: memref<2x64x128xf32, #tpu.memory_space<vmem>>, %arg2: memref<2x128x512xbf16, #tpu.memory_space<vmem>>, %arg3: memref<128x128xbf16, #tpu.memory_space<vmem>>, %arg4: memref<1x640xf32, #tpu.memory_space<vmem>>, %arg5: memref<64x128xf32, #tpu.memory_space<vmem>>, %arg6: memref<2x64x128xf32, #tpu.memory_space<vmem>>) attributes {dimension_semantics = [], scalar_prefetch = 0 : i64, scratch_operands = 0 : i64, tpu.core_type = #tpu.core_type<tc>} {
    %c0 = arith.constant 0 : index
    %c0_0 = arith.constant 0 : index
    %0 = vector.load %arg0[%c0, %c0_0] : memref<64x128xf32, #tpu.memory_space<vmem>>, vector<64x128xf32>
    %1 = arith.truncf %0 : vector<64x128xf32> to vector<64x128xbf16>
    %c0_1 = arith.constant 0 : index
    %c0_2 = arith.constant 0 : index
    %c0_3 = arith.constant 0 : index
    %2 = vector.load %arg1[%c0_1, %c0_2, %c0_3] : memref<2x64x128xf32, #tpu.memory_space<vmem>>, vector<1x64x128xf32>
    %3 = vector.shape_cast %2 : vector<1x64x128xf32> to vector<64x128xf32>
    %c1 = arith.constant 1 : index
    %c0_4 = arith.constant 0 : index
    %c0_5 = arith.constant 0 : index
    %4 = vector.load %arg1[%c1, %c0_4, %c0_5] : memref<2x64x128xf32, #tpu.memory_space<vmem>>, vector<1x64x128xf32>
    %5 = vector.shape_cast %4 : vector<1x64x128xf32> to vector<64x128xf32>
    %6 = arith.truncf %3 : vector<64x128xf32> to vector<64x128xbf16>
    %c0_6 = arith.constant 0 : index
    %c0_7 = arith.constant 0 : index
    %7 = vector.load %arg4[%c0_6, %c0_7] : memref<1x640xf32, #tpu.memory_space<vmem>>, vector<1x512xf32>
    %c0_8 = arith.constant 0 : index
    %c512 = arith.constant 512 : index
    %8 = vector.load %arg4[%c0_8, %c512] : memref<1x640xf32, #tpu.memory_space<vmem>>, vector<1x128xf32>
    %c0_9 = arith.constant 0 : index
    %c0_10 = arith.constant 0 : index
    %c0_11 = arith.constant 0 : index
    %9 = vector.load %arg2[%c0_9, %c0_10, %c0_11] : memref<2x128x512xbf16, #tpu.memory_space<vmem>>, vector<1x128x512xbf16>
    %10 = vector.shape_cast %9 : vector<1x128x512xbf16> to vector<128x512xbf16>
    %cst = arith.constant dense<0.000000e+00> : vector<64x512xf32>
    %11 = tpu.matmul %1, %10, %cst {dimension_numbers = #tpu.dot_dimension_numbers<[1], [0], [0], [1], [0, 0, 1, 1], [], []>} : vector<64x128xbf16>, vector<128x512xbf16>, vector<64x512xf32> -> vector<64x512xf32>
    %c1_12 = arith.constant 1 : index
    %c0_13 = arith.constant 0 : index
    %c0_14 = arith.constant 0 : index
    %12 = vector.load %arg2[%c1_12, %c0_13, %c0_14] : memref<2x128x512xbf16, #tpu.memory_space<vmem>>, vector<1x128x512xbf16>
    %13 = vector.shape_cast %12 : vector<1x128x512xbf16> to vector<128x512xbf16>
    %cst_15 = arith.constant dense<0.000000e+00> : vector<64x512xf32>
    %14 = tpu.matmul %6, %13, %cst_15 {dimension_numbers = #tpu.dot_dimension_numbers<[1], [0], [0], [1], [0, 0, 1, 1], [], []>} : vector<64x128xbf16>, vector<128x512xbf16>, vector<64x512xf32> -> vector<64x512xf32>
    %15 = arith.addf %11, %14 : vector<64x512xf32>
    %16 = vector.broadcast %7 : vector<1x512xf32> to vector<64x512xf32>
    %17 = arith.addf %15, %16 : vector<64x512xf32>
    %18 = vector.extract_strided_slice %17 {offsets = [0, 0], sizes = [64, 128], strides = [1, 1]} : vector<64x512xf32> to vector<64x128xf32>
    %19 = arith.negf %18 : vector<64x128xf32>
    %20 = math.exp %19 : vector<64x128xf32>
    %cst_16 = arith.constant 1.000000e+00 : f32
    %21 = vector.broadcast %cst_16 : f32 to vector<64x128xf32>
    %22 = arith.addf %21, %20 : vector<64x128xf32>
    %23 = arith.divf %21, %22 : vector<64x128xf32>
    %24 = vector.extract_strided_slice %17 {offsets = [0, 128], sizes = [64, 128], strides = [1, 1]} : vector<64x512xf32> to vector<64x128xf32>
    %25 = arith.negf %24 : vector<64x128xf32>
    %26 = math.exp %25 : vector<64x128xf32>
    %cst_17 = arith.constant 1.000000e+00 : f32
    %27 = vector.broadcast %cst_17 : f32 to vector<64x128xf32>
    %28 = arith.addf %27, %26 : vector<64x128xf32>
    %29 = arith.divf %27, %28 : vector<64x128xf32>
    %30 = vector.extract_strided_slice %17 {offsets = [0, 256], sizes = [64, 128], strides = [1, 1]} : vector<64x512xf32> to vector<64x128xf32>
    %31 = math.tanh %30 : vector<64x128xf32>
    %32 = vector.extract_strided_slice %17 {offsets = [0, 384], sizes = [64, 128], strides = [1, 1]} : vector<64x512xf32> to vector<64x128xf32>
    %33 = arith.negf %32 : vector<64x128xf32>
    %34 = math.exp %33 : vector<64x128xf32>
    %cst_18 = arith.constant 1.000000e+00 : f32
    %35 = vector.broadcast %cst_18 : f32 to vector<64x128xf32>
    %36 = arith.addf %35, %34 : vector<64x128xf32>
    %37 = arith.divf %35, %36 : vector<64x128xf32>
    %38 = arith.mulf %29, %5 : vector<64x128xf32>
    %39 = arith.mulf %23, %31 : vector<64x128xf32>
    %40 = arith.addf %38, %39 : vector<64x128xf32>
    %41 = math.tanh %40 : vector<64x128xf32>
    %42 = arith.mulf %37, %41 : vector<64x128xf32>
    %43 = arith.truncf %42 : vector<64x128xf32> to vector<64x128xbf16>
    %c0_19 = arith.constant 0 : index
    %c0_20 = arith.constant 0 : index
    %44 = vector.load %arg3[%c0_19, %c0_20] : memref<128x128xbf16, #tpu.memory_space<vmem>>, vector<128x128xbf16>
    %cst_21 = arith.constant dense<0.000000e+00> : vector<64x128xf32>
    %45 = tpu.matmul %43, %44, %cst_21 {dimension_numbers = #tpu.dot_dimension_numbers<[1], [0], [0], [1], [0, 0, 1, 1], [], []>} : vector<64x128xbf16>, vector<128x128xbf16>, vector<64x128xf32> -> vector<64x128xf32>
    %46 = vector.broadcast %8 : vector<1x128xf32> to vector<64x128xf32>
    %47 = arith.addf %45, %46 : vector<64x128xf32>
    %cst_22 = arith.constant dense<0xFF800000> : vector<128xf32>
    %48 = vector.multi_reduction <maximumf>, %47, %cst_22 [0] : vector<64x128xf32> to vector<128xf32>
    %49 = vector.shape_cast %48 : vector<128xf32> to vector<1x128xf32>
    %50 = vector.broadcast %49 : vector<1x128xf32> to vector<64x128xf32>
    %51 = arith.subf %47, %50 : vector<64x128xf32>
    %52 = math.exp %51 : vector<64x128xf32>
    %cst_23 = arith.constant dense<0.000000e+00> : vector<128xf32>
    %53 = vector.multi_reduction <add>, %52, %cst_23 [0] : vector<64x128xf32> to vector<128xf32>
    %54 = vector.shape_cast %53 : vector<128xf32> to vector<1x128xf32>
    %55 = math.log %54 : vector<1x128xf32>
    %56 = vector.broadcast %55 : vector<1x128xf32> to vector<64x128xf32>
    %57 = arith.subf %51, %56 : vector<64x128xf32>
    %c0_24 = arith.constant 0 : index
    %c0_25 = arith.constant 0 : index
    %58 = vector.load %arg5[%c0_24, %c0_25] : memref<64x128xf32, #tpu.memory_space<vmem>>, vector<64x128xf32>
    tpu.vector_store %arg5[%c0_24, %c0_25], %57 {strides = array<i32>} : memref<64x128xf32, #tpu.memory_space<vmem>>, vector<64x128xf32>,
    %c0_26 = arith.constant 0 : index
    %c0_27 = arith.constant 0 : index
    %c0_28 = arith.constant 0 : index
    %59 = vector.load %arg6[%c0_26, %c0_27, %c0_28] : memref<2x64x128xf32, #tpu.memory_space<vmem>>, vector<1x64x128xf32>
    %60 = vector.shape_cast %59 : vector<1x64x128xf32> to vector<64x128xf32>
    %61 = vector.shape_cast %42 : vector<64x128xf32> to vector<1x64x128xf32>
    tpu.vector_store %arg6[%c0_26, %c0_27, %c0_28], %61 {strides = array<i32>} : memref<2x64x128xf32, #tpu.memory_space<vmem>>, vector<1x64x128xf32>,
    %c1_29 = arith.constant 1 : index
    %c0_30 = arith.constant 0 : index
    %c0_31 = arith.constant 0 : index
    %62 = vector.load %arg6[%c1_29, %c0_30, %c0_31] : memref<2x64x128xf32, #tpu.memory_space<vmem>>, vector<1x64x128xf32>
    %63 = vector.shape_cast %62 : vector<1x64x128xf32> to vector<64x128xf32>
    %64 = vector.shape_cast %40 : vector<64x128xf32> to vector<1x64x128xf32>
    tpu.vector_store %arg6[%c1_29, %c0_30, %c0_31], %64 {strides = array<i32>} : memref<2x64x128xf32, #tpu.memory_space<vmem>>, vector<1x64x128xf32>,
    return
  }
}

</mosaic_0001>

<llo_original>
// kernel: rnn_forward.1
$region0: #{rnn_forward.1}
  #allocation0 [shape = 'u32[]', space=smem, size = 0x4, offset = 0x4, fixed_abs, tag = 'smem constant byte address 0x4 - core index']
  #allocation1 [shape = 'u32[144,128]{1,0:T(1,128)}', space=vmem, size = 0x12000, scoped, tag = 'internal scratch']
  %s0 = inlined_call_operand.vmem [shape: f32[64,128], index: 0, kind: input, shape index: {}]
  %s1 = inlined_call_operand.vmem [shape: f32[2,64,128], index: 1, kind: input, shape index: {}, may-alias: {1,6}]
  %s2 = inlined_call_operand.vmem [shape: bf16[2,128,512], index: 2, kind: input, shape index: {}]
  %s3 = inlined_call_operand.vmem [shape: bf16[128,128], index: 3, kind: input, shape index: {}]
  %s4 = inlined_call_operand.vmem [shape: f32[1,640], index: 4, kind: input, shape index: {}]
  %s5 = inlined_call_operand.vmem [shape: f32[64,128], index: 5, kind: output, shape index: {0}]
  %s6 = inlined_call_operand.vmem [shape: f32[2,64,128], index: 6, kind: output, shape index: {1}, may-alias: {1,6}]
  %7 = xla_tuple %s5, %s6
  %s8 = sld [smem:[#allocation0]]
  $region38: #{rnn_forward.1} parent=0
    _
  %s10 = ssub.s32 1, %s8
  %s11 = scalar_select 0, %s10, %s8
  // Predicated region
  $region2: #{rnn_forward.1} parent=0 // pred_check
    _
  $region3: #{rnn_forward.1} parent=0 // pred_check_branch
    %13 = sbr.rel (0) target = $region5
  $region4: #{rnn_forward.1} parent=0 // pred_region
    _
  $region5: #{rnn_forward.1} parent=0 // pred_fallthru
    _
  // Predicated region
  $region6: #{rnn_forward.1} parent=0 // pred_check
    _
  $region7: #{rnn_forward.1} parent=0 // pred_check_branch
    %15 = sbr.rel (0) target = $region9
  $region8: #{rnn_forward.1} parent=0 // pred_region
    _
  $region9: #{rnn_forward.1} parent=0 // pred_fallthru
    _
  // Predicated region
  $region10: #{rnn_forward.1} parent=0 // pred_check
    _
  $region11: #{rnn_forward.1} parent=0 // pred_check_branch
    %17 = sbr.rel (0) target = $region13
  $region12: #{rnn_forward.1} parent=0 // pred_region
    _
  $region13: #{rnn_forward.1} parent=0 // pred_fallthru
    _
  // Predicated region
  $region14: #{rnn_forward.1} parent=0 // pred_check
    _
  $region15: #{rnn_forward.1} parent=0 // pred_check_branch
    %19 = sbr.rel (0) target = $region17
  $region16: #{rnn_forward.1} parent=0 // pred_region
    _
  $region17: #{rnn_forward.1} parent=0 // pred_fallthru
    _
  // Predicated region
  $region18: #{rnn_forward.1} parent=0 // pred_check
    _
  $region19: #{rnn_forward.1} parent=0 // pred_check_branch
    %21 = sbr.rel (0) target = $region21
  $region20: #{rnn_forward.1} parent=0 // pred_region
    _
  $region21: #{rnn_forward.1} parent=0 // pred_fallthru
    _
  %v23 = vld [vmem:[%s0] sm:$0xff]
  %v24 = vld [vmem:[%s0 + $0x8] sm:$0xff]
  %v25 = vld [vmem:[%s0 + $0x10] sm:$0xff]
  %v26 = vld [vmem:[%s0 + $0x18] sm:$0xff]
  %v27 = vld [vmem:[%s0 + $0x20] sm:$0xff]
  %v28 = vld [vmem:[%s0 + $0x28] sm:$0xff]
  %v29 = vld [vmem:[%s0 + $0x30] sm:$0xff]
  %v30 = vld [vmem:[%s0 + $0x38] sm:$0xff]
  %v31 = vpack.c.bf16 %v24, %v23
  %v32 = vpack.c.bf16 %v26, %v25
  %v33 = vpack.c.bf16 %v28, %v27
  %v34 = vpack.c.bf16 %v30, %v29
  %v35 = vld [vmem:[%s1] sm:$0xff]
  %v36 = vld [vmem:[%s1 + $0x8] sm:$0xff]
  %v37 = vld [vmem:[%s1 + $0x10] sm:$0xff]
  %v38 = vld [vmem:[%s1 + $0x18] sm:$0xff]
  %v39 = vld [vmem:[%s1 + $0x20] sm:$0xff]
  %v40 = vld [vmem:[%s1 + $0x28] sm:$0xff]
  %v41 = vld [vmem:[%s1 + $0x30] sm:$0xff]
  %v42 = vld [vmem:[%s1 + $0x38] sm:$0xff]
  %s43 = scalar_lea.vmem %s1, 64
  %v44 = vld [vmem:[%s43] sm:$0xff]
  %v45 = vld [vmem:[%s43 + $0x8] sm:$0xff]
  %v46 = vld [vmem:[%s43 + $0x10] sm:$0xff]
  %v47 = vld [vmem:[%s43 + $0x18] sm:$0xff]
  %v48 = vld [vmem:[%s43 + $0x20] sm:$0xff]
  %v49 = vld [vmem:[%s43 + $0x28] sm:$0xff]
  %v50 = vld [vmem:[%s43 + $0x30] sm:$0xff]
  %v51 = vld [vmem:[%s43 + $0x38] sm:$0xff]
  %v52 = vpack.c.bf16 %v36, %v35
  %v53 = vpack.c.bf16 %v38, %v37
  %v54 = vpack.c.bf16 %v40, %v39
  %v55 = vpack.c.bf16 %v42, %v41
  %v56 = vld [vmem:[%s4] sm:$0xf]
  %v57 = vld [vmem:[%s4 + $0x4] sm:$0x1]
  %v58 = vld [vmem:[%s2] sm:$0xff]
  %v59 = vld [vmem:[%s2 + $0x8] sm:$0xff]
  %v60 = vld [vmem:[%s2 + $0x10] sm:$0xff]
  %v61 = vld [vmem:[%s2 + $0x18] sm:$0xff]
  %v62 = vld [vmem:[%s2 + $0x20] sm:$0xff]
  %v63 = vld [vmem:[%s2 + $0x28] sm:$0xff]
  %v64 = vld [vmem:[%s2 + $0x30] sm:$0xff]
  %v65 = vld [vmem:[%s2 + $0x38] sm:$0xff]
  %v66 = vld [vmem:[%s2 + $0x40] sm:$0xff]
  %v67 = vld [vmem:[%s2 + $0x48] sm:$0xff]
  %v68 = vld [vmem:[%s2 + $0x50] sm:$0xff]
  %v69 = vld [vmem:[%s2 + $0x58] sm:$0xff]
  %v70 = vld [vmem:[%s2 + $0x60] sm:$0xff]
  %v71 = vld [vmem:[%s2 + $0x68] sm:$0xff]
  %v72 = vld [vmem:[%s2 + $0x70] sm:$0xff]
  %v73 = vld [vmem:[%s2 + $0x78] sm:$0xff]
  %v74 = vld [vmem:[%s2 + $0x80] sm:$0xff]
  %v75 = vld [vmem:[%s2 + $0x88] sm:$0xff]
  %v76 = vld [vmem:[%s2 + $0x90] sm:$0xff]
  %v77 = vld [vmem:[%s2 + $0x98] sm:$0xff]
  %v78 = vld [vmem:[%s2 + $0xa0] sm:$0xff]
  %v79 = vld [vmem:[%s2 + $0xa8] sm:$0xff]
  %v80 = vld [vmem:[%s2 + $0xb0] sm:$0xff]
  %v81 = vld [vmem:[%s2 + $0xb8] sm:$0xff]
  %v82 = vld [vmem:[%s2 + $0xc0] sm:$0xff]
  %v83 = vld [vmem:[%s2 + $0xc8] sm:$0xff]
  %v84 = vld [vmem:[%s2 + $0xd0] sm:$0xff]
  %v85 = vld [vmem:[%s2 + $0xd8] sm:$0xff]
  %v86 = vld [vmem:[%s2 + $0xe0] sm:$0xff]
  %v87 = vld [vmem:[%s2 + $0xe8] sm:$0xff]
  %v88 = vld [vmem:[%s2 + $0xf0] sm:$0xff]
  %v89 = vld [vmem:[%s2 + $0xf8] sm:$0xff]
  %s90 = scalar_lea.vmem %s2, 256
  %v91 = vld [vmem:[%s90] sm:$0xff]
  %v92 = vld [vmem:[%s90 + $0x8] sm:$0xff]
  %v93 = vld [vmem:[%s90 + $0x10] sm:$0xff]
  %v94 = vld [vmem:[%s90 + $0x18] sm:$0xff]
  %v95 = vld [vmem:[%s90 + $0x20] sm:$0xff]
  %v96 = vld [vmem:[%s90 + $0x28] sm:$0xff]
  %v97 = vld [vmem:[%s90 + $0x30] sm:$0xff]
  %v98 = vld [vmem:[%s90 + $0x38] sm:$0xff]
  %v99 = vld [vmem:[%s90 + $0x40] sm:$0xff]
  %v100 = vld [vmem:[%s90 + $0x48] sm:$0xff]
  %v101 = vld [vmem:[%s90 + $0x50] sm:$0xff]
  %v102 = vld [vmem:[%s90 + $0x58] sm:$0xff]
  %v103 = vld [vmem:[%s90 + $0x60] sm:$0xff]
  %v104 = vld [vmem:[%s90 + $0x68] sm:$0xff]
  %v105 = vld [vmem:[%s90 + $0x70] sm:$0xff]
  %v106 = vld [vmem:[%s90 + $0x78] sm:$0xff]
  %v107 = vld [vmem:[%s90 + $0x80] sm:$0xff]
  %v108 = vld [vmem:[%s90 + $0x88] sm:$0xff]
  %v109 = vld [vmem:[%s90 + $0x90] sm:$0xff]
  %v110 = vld [vmem:[%s90 + $0x98] sm:$0xff]
  %v111 = vld [vmem:[%s90 + $0xa0] sm:$0xff]
  %v112 = vld [vmem:[%s90 + $0xa8] sm:$0xff]
  %v113 = vld [vmem:[%s90 + $0xb0] sm:$0xff]
  %v114 = vld [vmem:[%s90 + $0xb8] sm:$0xff]
  %v115 = vld [vmem:[%s90 + $0xc0] sm:$0xff]
  %v116 = vld [vmem:[%s90 + $0xc8] sm:$0xff]
  %v117 = vld [vmem:[%s90 + $0xd0] sm:$0xff]
  %v118 = vld [vmem:[%s90 + $0xd8] sm:$0xff]
  %v119 = vld [vmem:[%s90 + $0xe0] sm:$0xff]
  %v120 = vld [vmem:[%s90 + $0xe8] sm:$0xff]
  %v121 = vld [vmem:[%s90 + $0xf0] sm:$0xff]
  %v122 = vld [vmem:[%s90 + $0xf8] sm:$0xff]
  %v155 = vunpack.c.l.b16 %v91
  %v156 = vunpack.c.h.b16 %v91
  %v157 = vunpack.c.l.b16 %v92
  %v158 = vunpack.c.h.b16 %v92
  %v159 = vunpack.c.l.b16 %v93
  %v160 = vunpack.c.h.b16 %v93
  %v161 = vunpack.c.l.b16 %v94
  %v162 = vunpack.c.h.b16 %v94
  %v163 = vunpack.c.l.b16 %v95
  %v164 = vunpack.c.h.b16 %v95
  %v165 = vunpack.c.l.b16 %v96
  %v166 = vunpack.c.h.b16 %v96
  %v167 = vunpack.c.l.b16 %v97
  %v168 = vunpack.c.h.b16 %v97
  %v169 = vunpack.c.l.b16 %v98
  %v170 = vunpack.c.h.b16 %v98
  %v171 = vunpack.c.l.b16 %v99
  %v172 = vunpack.c.h.b16 %v99
  %v173 = vunpack.c.l.b16 %v100
  %v174 = vunpack.c.h.b16 %v100
  %v175 = vunpack.c.l.b16 %v101
  %v176 = vunpack.c.h.b16 %v101
  %v177 = vunpack.c.l.b16 %v102
  %v178 = vunpack.c.h.b16 %v102
  %v179 = vunpack.c.l.b16 %v103
  %v180 = vunpack.c.h.b16 %v103
  %v181 = vunpack.c.l.b16 %v104
  %v182 = vunpack.c.h.b16 %v104
  %v183 = vunpack.c.l.b16 %v105
  %v184 = vunpack.c.h.b16 %v105
  %v185 = vunpack.c.l.b16 %v106
  %v186 = vunpack.c.h.b16 %v106
  %v187 = vunpack.c.l.b16 %v107
  %v188 = vunpack.c.h.b16 %v107
  %v189 = vunpack.c.l.b16 %v108
  %v190 = vunpack.c.h.b16 %v108
  %v191 = vunpack.c.l.b16 %v109
  %v192 = vunpack.c.h.b16 %v109
  %v193 = vunpack.c.l.b16 %v110
  %v194 = vunpack.c.h.b16 %v110
  %v195 = vunpack.c.l.b16 %v111
  %v196 = vunpack.c.h.b16 %v111
  %v197 = vunpack.c.l.b16 %v112
  %v198 = vunpack.c.h.b16 %v112
  %v199 = vunpack.c.l.b16 %v113
  %v200 = vunpack.c.h.b16 %v113
  %v201 = vunpack.c.l.b16 %v114
  %v202 = vunpack.c.h.b16 %v114
  %v203 = vunpack.c.l.b16 %v115
  %v204 = vunpack.c.h.b16 %v115
  %v205 = vunpack.c.l.b16 %v116
  %v206 = vunpack.c.h.b16 %v116
  %v207 = vunpack.c.l.b16 %v117
  %v208 = vunpack.c.h.b16 %v117
  %v209 = vunpack.c.l.b16 %v118
  %v210 = vunpack.c.h.b16 %v118
  %v211 = vunpack.c.l.b16 %v119
  %v212 = vunpack.c.h.b16 %v119
  %v213 = vunpack.c.l.b16 %v120
  %v214 = vunpack.c.h.b16 %v120
  %v215 = vunpack.c.l.b16 %v121
  %v216 = vunpack.c.h.b16 %v121
  %v217 = vunpack.c.l.b16 %v122
  %v218 = vunpack.c.h.b16 %v122
  %v219 = vpack.c.b16 %v159, %v155
  %v220 = vpack.c.b16 %v160, %v156
  %v221 = vpack.c.b16 %v161, %v157
  %v222 = vpack.c.b16 %v162, %v158
  %v223 = vpack.c.b16 %v167, %v163
  %v224 = vpack.c.b16 %v168, %v164
  %v225 = vpack.c.b16 %v169, %v165
  %v226 = vpack.c.b16 %v170, %v166
  %v227 = vpack.c.b16 %v175, %v171
  %v228 = vpack.c.b16 %v176, %v172
  %v229 = vpack.c.b16 %v177, %v173
  %v230 = vpack.c.b16 %v178, %v174
  %v231 = vpack.c.b16 %v183, %v179
  %v232 = vpack.c.b16 %v184, %v180
  %v233 = vpack.c.b16 %v185, %v181
  %v234 = vpack.c.b16 %v186, %v182
  %v235 = vpack.c.b16 %v191, %v187
  %v236 = vpack.c.b16 %v192, %v188
  %v237 = vpack.c.b16 %v193, %v189
  %v238 = vpack.c.b16 %v194, %v190
  %v239 = vpack.c.b16 %v199, %v195
  %v240 = vpack.c.b16 %v200, %v196
  %v241 = vpack.c.b16 %v201, %v197
  %v242 = vpack.c.b16 %v202, %v198
  %v243 = vpack.c.b16 %v207, %v203
  %v244 = vpack.c.b16 %v208, %v204
  %v245 = vpack.c.b16 %v209, %v205
  %v246 = vpack.c.b16 %v210, %v206
  %v247 = vpack.c.b16 %v215, %v211
  %v248 = vpack.c.b16 %v216, %v212
  %v249 = vpack.c.b16 %v217, %v213
  %v250 = vpack.c.b16 %v218, %v214
  %283 = vmatprep.subr.bf16.mxu0 %v248
  %284 = vmatpush1.bf16.msra.mxu0 %v247
  %285 = vmatprep.subr.bf16.mxu0 %v244
  %286 = vmatpush1.bf16.msra.mxu0 %v243
  %287 = vmatprep.subr.bf16.mxu0 %v240
  %288 = vmatpush1.bf16.msra.mxu0 %v239
  %289 = vmatprep.subr.bf16.mxu0 %v236
  %290 = vmatpush1.bf16.msra.mxu0 %v235
  %291 = vmatprep.subr.bf16.mxu0 %v232
  %292 = vmatpush1.bf16.msra.mxu0 %v231
  %293 = vmatprep.subr.bf16.mxu0 %v228
  %294 = vmatpush1.bf16.msra.mxu0 %v227
  %295 = vmatprep.subr.bf16.mxu0 %v224
  %296 = vmatpush1.bf16.msra.mxu0 %v223
  %297 = vmatprep.subr.bf16.mxu0 %v220
  %298 = vmatpush1.bf16.msra.mxu0 %v219
  %299 = vmatprep.subr.bf16.mxu0 0
  %300 = vmatpush2.bf16.msra.mxu0 0
  %301 = vmatprep.subr.bf16.mxu0 0
  %302 = vmatpush2.bf16.msra.mxu0 0
  %303 = vmatprep.subr.bf16.mxu0 0
  %304 = vmatpush2.bf16.msra.mxu0 0
  %305 = vmatprep.subr.bf16.mxu0 0
  %306 = vmatpush2.bf16.msra.mxu0 0
  %307 = vmatprep.subr.bf16.mxu0 0
  %308 = vmatpush2.bf16.msra.mxu0 0
  %309 = vmatprep.subr.bf16.mxu0 0
  %310 = vmatpush2.bf16.msra.mxu0 0
  %311 = vmatprep.subr.bf16.mxu0 0
  %312 = vmatpush2.bf16.msra.mxu0 0
  %313 = vmatprep.subr.bf16.mxu0 0
  %314 = vmatpush2.bf16.msra.mxu0 0
  %315 = vmatprep.mubr.bf16.mxu0 0
  %316 = vmatmul.mubr.bf16.gmra.mxu0 %v52
  %v317 = vpop.f32.mrf.mxu0
  %v318 = vadd.f32 0.0, %v317
  %v319 = vpop.f32.mrf.mxu0
  %v320 = vadd.f32 0.0, %v319
  %v321 = vpop.f32.mrf.mxu0
  %v322 = vadd.f32 0.0, %v321
  %v323 = vpop.f32.mrf.mxu0
  %v324 = vadd.f32 0.0, %v323
  %325 = vmatprep.mubr.bf16.mxu0 0
  %326 = vmatmul.mubr.bf16.gmra.mxu0 %v53
  %v327 = vpop.f32.mrf.mxu0
  %v328 = vadd.f32 0.0, %v327
  %v329 = vpop.f32.mrf.mxu0
  %v330 = vadd.f32 0.0, %v329
  %v331 = vpop.f32.mrf.mxu0
  %v332 = vadd.f32 0.0, %v331
  %v333 = vpop.f32.mrf.mxu0
  %v334 = vadd.f32 0.0, %v333
  %335 = vmatprep.mubr.bf16.mxu0 0
  %336 = vmatmul.mubr.bf16.gmra.mxu0 %v54
  %v337 = vpop.f32.mrf.mxu0
  %v338 = vadd.f32 0.0, %v337
  %v339 = vpop.f32.mrf.mxu0
  %v340 = vadd.f32 0.0, %v339
  %v341 = vpop.f32.mrf.mxu0
  %v342 = vadd.f32 0.0, %v341
  %v343 = vpop.f32.mrf.mxu0
  %v344 = vadd.f32 0.0, %v343
  %345 = vmatprep.mubr.bf16.mxu0 0
  %346 = vmatmul.mubr.bf16.gmra.mxu0 %v55
  %v347 = vpop.f32.mrf.mxu0
  %v348 = vadd.f32 0.0, %v347
  %v349 = vpop.f32.mrf.mxu0
  %v350 = vadd.f32 0.0, %v349
  %v351 = vpop.f32.mrf.mxu0
  %v352 = vadd.f32 0.0, %v351
  %v353 = vpop.f32.mrf.mxu0
  %v354 = vadd.f32 0.0, %v353
  %355 = vdwg.mxu0
  %356 = vmatprep.subr.bf16.mxu0 %v250
  %357 = vmatpush1.bf16.msra.mxu0 %v249
  %358 = vmatprep.subr.bf16.mxu0 %v246
  %359 = vmatpush1.bf16.msra.mxu0 %v245
  %360 = vmatprep.subr.bf16.mxu0 %v242
  %361 = vmatpush1.bf16.msra.mxu0 %v241
  %362 = vmatprep.subr.bf16.mxu0 %v238
  %363 = vmatpush1.bf16.msra.mxu0 %v237
  %364 = vmatprep.subr.bf16.mxu0 %v234
  %365 = vmatpush1.bf16.msra.mxu0 %v233
  %366 = vmatprep.subr.bf16.mxu0 %v230
  %367 = vmatpush1.bf16.msra.mxu0 %v229
  %368 = vmatprep.subr.bf16.mxu0 %v226
  %369 = vmatpush1.bf16.msra.mxu0 %v225
  %370 = vmatprep.subr.bf16.mxu0 %v222
  %371 = vmatpush1.bf16.msra.mxu0 %v221
  %372 = vmatprep.subr.bf16.mxu0 0
  %373 = vmatpush2.bf16.msra.mxu0 0
  %374 = vmatprep.subr.bf16.mxu0 0
  %375 = vmatpush2.bf16.msra.mxu0 0
  %376 = vmatprep.subr.bf16.mxu0 0
  %377 = vmatpush2.bf16.msra.mxu0 0
  %378 = vmatprep.subr.bf16.mxu0 0
  %379 = vmatpush2.bf16.msra.mxu0 0
  %380 = vmatprep.subr.bf16.mxu0 0
  %381 = vmatpush2.bf16.msra.mxu0 0
  %382 = vmatprep.subr.bf16.mxu0 0
  %383 = vmatpush2.bf16.msra.mxu0 0
  %384 = vmatprep.subr.bf16.mxu0 0
  %385 = vmatpush2.bf16.msra.mxu0 0
  %386 = vmatprep.subr.bf16.mxu0 0
  %387 = vmatpush2.bf16.msra.mxu0 0
  %388 = vmatprep.mubr.bf16.mxu0 0
  %389 = vmatmul.mubr.bf16.gmra.mxu0 %v52
  %v390 = vpop.f32.mrf.mxu0
  %v391 = vadd.f32 0.0, %v390
  %v392 = vpop.f32.mrf.mxu0
  %v393 = vadd.f32 0.0, %v392
  %v394 = vpop.f32.mrf.mxu0
  %v395 = vadd.f32 0.0, %v394
  %v396 = vpop.f32.mrf.mxu0
  %v397 = vadd.f32 0.0, %v396
  %398 = vmatprep.mubr.bf16.mxu0 0
  %399 = vmatmul.mubr.bf16.gmra.mxu0 %v53
  %v400 = vpop.f32.mrf.mxu0
  %v401 = vadd.f32 0.0, %v400
  %v402 = vpop.f32.mrf.mxu0
  %v403 = vadd.f32 0.0, %v402
  %v404 = vpop.f32.mrf.mxu0
  %v405 = vadd.f32 0.0, %v404
  %v406 = vpop.f32.mrf.mxu0
  %v407 = vadd.f32 0.0, %v406
  %408 = vmatprep.mubr.bf16.mxu0 0
  %409 = vmatmul.mubr.bf16.gmra.mxu0 %v54
  %v410 = vpop.f32.mrf.mxu0
  %v411 = vadd.f32 0.0, %v410
  %v412 = vpop.f32.mrf.mxu0
  %v413 = vadd.f32 0.0, %v412
  %v414 = vpop.f32.mrf.mxu0
  %v415 = vadd.f32 0.0, %v414
  %v416 = vpop.f32.mrf.mxu0
  %v417 = vadd.f32 0.0, %v416
  %418 = vmatprep.mubr.bf16.mxu0 0
  %419 = vmatmul.mubr.bf16.gmra.mxu0 %v55
  %v420 = vpop.f32.mrf.mxu0
  %v421 = vadd.f32 0.0, %v420
  %v422 = vpop.f32.mrf.mxu0
  %v423 = vadd.f32 0.0, %v422
  %v424 = vpop.f32.mrf.mxu0
  %v425 = vadd.f32 0.0, %v424
  %v426 = vpop.f32.mrf.mxu0
  %v427 = vadd.f32 0.0, %v426
  %428 = vdwg.mxu0
  %v461 = vunpack.c.l.b16 %v58
  %v462 = vunpack.c.h.b16 %v58
  %v463 = vunpack.c.l.b16 %v59
  %v464 = vunpack.c.h.b16 %v59
  %v465 = vunpack.c.l.b16 %v60
  %v466 = vunpack.c.h.b16 %v60
  %v467 = vunpack.c.l.b16 %v61
  %v468 = vunpack.c.h.b16 %v61
  %v469 = vunpack.c.l.b16 %v62
  %v470 = vunpack.c.h.b16 %v62
  %v471 = vunpack.c.l.b16 %v63
  %v472 = vunpack.c.h.b16 %v63
  %v473 = vunpack.c.l.b16 %v64
  %v474 = vunpack.c.h.b16 %v64
  %v475 = vunpack.c.l.b16 %v65
  %v476 = vunpack.c.h.b16 %v65
  %v477 = vunpack.c.l.b16 %v66
  %v478 = vunpack.c.h.b16 %v66
  %v479 = vunpack.c.l.b16 %v67
  %v480 = vunpack.c.h.b16 %v67
  %v481 = vunpack.c.l.b16 %v68
  %v482 = vunpack.c.h.b16 %v68
  %v483 = vunpack.c.l.b16 %v69
  %v484 = vunpack.c.h.b16 %v69
  %v485 = vunpack.c.l.b16 %v70
  %v486 = vunpack.c.h.b16 %v70
  %v487 = vunpack.c.l.b16 %v71
  %v488 = vunpack.c.h.b16 %v71
  %v489 = vunpack.c.l.b16 %v72
  %v490 = vunpack.c.h.b16 %v72
  %v491 = vunpack.c.l.b16 %v73
  %v492 = vunpack.c.h.b16 %v73
  %v493 = vunpack.c.l.b16 %v74
  %v494 = vunpack.c.h.b16 %v74
  %v495 = vunpack.c.l.b16 %v75
  %v496 = vunpack.c.h.b16 %v75
  %v497 = vunpack.c.l.b16 %v76
  %v498 = vunpack.c.h.b16 %v76
  %v499 = vunpack.c.l.b16 %v77
  %v500 = vunpack.c.h.b16 %v77
  %v501 = vunpack.c.l.b16 %v78
  %v502 = vunpack.c.h.b16 %v78
  %v503 = vunpack.c.l.b16 %v79
  %v504 = vunpack.c.h.b16 %v79
  %v505 = vunpack.c.l.b16 %v80
  %v506 = vunpack.c.h.b16 %v80
  %v507 = vunpack.c.l.b16 %v81
  %v508 = vunpack.c.h.b16 %v81
  %v509 = vunpack.c.l.b16 %v82
  %v510 = vunpack.c.h.b16 %v82
  %v511 = vunpack.c.l.b16 %v83
  %v512 = vunpack.c.h.b16 %v83
  %v513 = vunpack.c.l.b16 %v84
  %v514 = vunpack.c.h.b16 %v84
  %v515 = vunpack.c.l.b16 %v85
  %v516 = vunpack.c.h.b16 %v85
  %v517 = vunpack.c.l.b16 %v86
  %v518 = vunpack.c.h.b16 %v86
  %v519 = vunpack.c.l.b16 %v87
  %v520 = vunpack.c.h.b16 %v87
  %v521 = vunpack.c.l.b16 %v88
  %v522 = vunpack.c.h.b16 %v88
  %v523 = vunpack.c.l.b16 %v89
  %v524 = vunpack.c.h.b16 %v89
  %v525 = vpack.c.b16 %v465, %v461
  %v526 = vpack.c.b16 %v466, %v462
  %v527 = vpack.c.b16 %v467, %v463
  %v528 = vpack.c.b16 %v468, %v464
  %v529 = vpack.c.b16 %v473, %v469
  %v530 = vpack.c.b16 %v474, %v470
  %v531 = vpack.c.b16 %v475, %v471
  %v532 = vpack.c.b16 %v476, %v472
  %v533 = vpack.c.b16 %v481, %v477
  %v534 = vpack.c.b16 %v482, %v478
  %v535 = vpack.c.b16 %v483, %v479
  %v536 = vpack.c.b16 %v484, %v480
  %v537 = vpack.c.b16 %v489, %v485
  %v538 = vpack.c.b16 %v490, %v486
  %v539 = vpack.c.b16 %v491, %v487
  %v540 = vpack.c.b16 %v492, %v488
  %v541 = vpack.c.b16 %v497, %v493
  %v542 = vpack.c.b16 %v498, %v494
  %v543 = vpack.c.b16 %v499, %v495
  %v544 = vpack.c.b16 %v500, %v496
  %v545 = vpack.c.b16 %v505, %v501
  %v546 = vpack.c.b16 %v506, %v502
  %v547 = vpack.c.b16 %v507, %v503
  %v548 = vpack.c.b16 %v508, %v504
  %v549 = vpack.c.b16 %v513, %v509
  %v550 = vpack.c.b16 %v514, %v510
  %v551 = vpack.c.b16 %v515, %v511
  %v552 = vpack.c.b16 %v516, %v512
  %v553 = vpack.c.b16 %v521, %v517
  %v554 = vpack.c.b16 %v522, %v518
  %v555 = vpack.c.b16 %v523, %v519
  %v556 = vpack.c.b16 %v524, %v520
  %589 = vmatprep.subr.bf16.mxu0 %v554
  %590 = vmatpush1.bf16.msra.mxu0 %v553
  %591 = vmatprep.subr.bf16.mxu0 %v550
  %592 = vmatpush1.bf16.msra.mxu0 %v549
  %593 = vmatprep.subr.bf16.mxu0 %v546
  %594 = vmatpush1.bf16.msra.mxu0 %v545
  %595 = vmatprep.subr.bf16.mxu0 %v542
  %596 = vmatpush1.bf16.msra.mxu0 %v541
  %597 = vmatprep.subr.bf16.mxu0 %v538
  %598 = vmatpush1.bf16.msra.mxu0 %v537
  %599 = vmatprep.subr.bf16.mxu0 %v534
  %600 = vmatpush1.bf16.msra.mxu0 %v533
  %601 = vmatprep.subr.bf16.mxu0 %v530
  %602 = vmatpush1.bf16.msra.mxu0 %v529
  %603 = vmatprep.subr.bf16.mxu0 %v526
  %604 = vmatpush1.bf16.msra.mxu0 %v525
  %605 = vmatprep.subr.bf16.mxu0 0
  %606 = vmatpush2.bf16.msra.mxu0 0
  %607 = vmatprep.subr.bf16.mxu0 0
  %608 = vmatpush2.bf16.msra.mxu0 0
  %609 = vmatprep.subr.bf16.mxu0 0
  %610 = vmatpush2.bf16.msra.mxu0 0
  %611 = vmatprep.subr.bf16.mxu0 0
  %612 = vmatpush2.bf16.msra.mxu0 0
  %613 = vmatprep.subr.bf16.mxu0 0
  %614 = vmatpush2.bf16.msra.mxu0 0
  %615 = vmatprep.subr.bf16.mxu0 0
  %616 = vmatpush2.bf16.msra.mxu0 0
  %617 = vmatprep.subr.bf16.mxu0 0
  %618 = vmatpush2.bf16.msra.mxu0 0
  %619 = vmatprep.subr.bf16.mxu0 0
  %620 = vmatpush2.bf16.msra.mxu0 0
  %621 = vmatprep.mubr.bf16.mxu0 0
  %622 = vmatmul.mubr.bf16.gmra.mxu0 %v31
  %v623 = vpop.f32.mrf.mxu0
  %v624 = vadd.f32 %v318, %v623
  %v625 = vpop.f32.mrf.mxu0
  %v626 = vadd.f32 %v320, %v625
  %v627 = vpop.f32.mrf.mxu0
  %v628 = vadd.f32 %v322, %v627
  %v629 = vpop.f32.mrf.mxu0
  %v630 = vadd.f32 %v324, %v629
  %631 = vmatprep.mubr.bf16.mxu0 0
  %632 = vmatmul.mubr.bf16.gmra.mxu0 %v32
  %v633 = vpop.f32.mrf.mxu0
  %v634 = vadd.f32 %v328, %v633
  %v635 = vpop.f32.mrf.mxu0
  %v636 = vadd.f32 %v330, %v635
  %v637 = vpop.f32.mrf.mxu0
  %v638 = vadd.f32 %v332, %v637
  %v639 = vpop.f32.mrf.mxu0
  %v640 = vadd.f32 %v334, %v639
  %641 = vmatprep.mubr.bf16.mxu0 0
  %642 = vmatmul.mubr.bf16.gmra.mxu0 %v33
  %v643 = vpop.f32.mrf.mxu0
  %v644 = vadd.f32 %v338, %v643
  %v645 = vpop.f32.mrf.mxu0
  %v646 = vadd.f32 %v340, %v645
  %v647 = vpop.f32.mrf.mxu0
  %v648 = vadd.f32 %v342, %v647
  %v649 = vpop.f32.mrf.mxu0
  %v650 = vadd.f32 %v344, %v649
  %651 = vmatprep.mubr.bf16.mxu0 0
  %652 = vmatmul.mubr.bf16.gmra.mxu0 %v34
  %v653 = vpop.f32.mrf.mxu0
  %v654 = vadd.f32 %v348, %v653
  %v655 = vpop.f32.mrf.mxu0
  %v656 = vadd.f32 %v350, %v655
  %v657 = vpop.f32.mrf.mxu0
  %v658 = vadd.f32 %v352, %v657
  %v659 = vpop.f32.mrf.mxu0
  %v660 = vadd.f32 %v354, %v659
  %661 = vdwg.mxu0
  %662 = vmatprep.subr.bf16.mxu0 %v556
  %663 = vmatpush1.bf16.msra.mxu0 %v555
  %664 = vmatprep.subr.bf16.mxu0 %v552
  %665 = vmatpush1.bf16.msra.mxu0 %v551
  %666 = vmatprep.subr.bf16.mxu0 %v548
  %667 = vmatpush1.bf16.msra.mxu0 %v547
  %668 = vmatprep.subr.bf16.mxu0 %v544
  %669 = vmatpush1.bf16.msra.mxu0 %v543
  %670 = vmatprep.subr.bf16.mxu0 %v540
  %671 = vmatpush1.bf16.msra.mxu0 %v539
  %672 = vmatprep.subr.bf16.mxu0 %v536
  %673 = vmatpush1.bf16.msra.mxu0 %v535
  %674 = vmatprep.subr.bf16.mxu0 %v532
  %675 = vmatpush1.bf16.msra.mxu0 %v531
  %676 = vmatprep.subr.bf16.mxu0 %v528
  %677 = vmatpush1.bf16.msra.mxu0 %v527
  %678 = vmatprep.subr.bf16.mxu0 0
  %679 = vmatpush2.bf16.msra.mxu0 0
  %680 = vmatprep.subr.bf16.mxu0 0
  %681 = vmatpush2.bf16.msra.mxu0 0
  %682 = vmatprep.subr.bf16.mxu0 0
  %683 = vmatpush2.bf16.msra.mxu0 0
  %684 = vmatprep.subr.bf16.mxu0 0
  %685 = vmatpush2.bf16.msra.mxu0 0
  %686 = vmatprep.subr.bf16.mxu0 0
  %687 = vmatpush2.bf16.msra.mxu0 0
  %688 = vmatprep.subr.bf16.mxu0 0
  %689 = vmatpush2.bf16.msra.mxu0 0
  %690 = vmatprep.subr.bf16.mxu0 0
  %691 = vmatpush2.bf16.msra.mxu0 0
  %692 = vmatprep.subr.bf16.mxu0 0
  %693 = vmatpush2.bf16.msra.mxu0 0
  %694 = vmatprep.mubr.bf16.mxu0 0
  %695 = vmatmul.mubr.bf16.gmra.mxu0 %v31
  %v696 = vpop.f32.mrf.mxu0
  %v697 = vadd.f32 %v391, %v696
  %v698 = vpop.f32.mrf.mxu0
  %v699 = vadd.f32 %v393, %v698
  %v700 = vpop.f32.mrf.mxu0
  %v701 = vadd.f32 %v395, %v700
  %v702 = vpop.f32.mrf.mxu0
  %v703 = vadd.f32 %v397, %v702
  %704 = vmatprep.mubr.bf16.mxu0 0
  %705 = vmatmul.mubr.bf16.gmra.mxu0 %v32
  %v706 = vpop.f32.mrf.mxu0
  %v707 = vadd.f32 %v401, %v706
  %v708 = vpop.f32.mrf.mxu0
  %v709 = vadd.f32 %v403, %v708
  %v710 = vpop.f32.mrf.mxu0
  %v711 = vadd.f32 %v405, %v710
  %v712 = vpop.f32.mrf.mxu0
  %v713 = vadd.f32 %v407, %v712
  %714 = vmatprep.mubr.bf16.mxu0 0
  %715 = vmatmul.mubr.bf16.gmra.mxu0 %v33
  %v716 = vpop.f32.mrf.mxu0
  %v717 = vadd.f32 %v411, %v716
  %v718 = vpop.f32.mrf.mxu0
  %v719 = vadd.f32 %v413, %v718
  %v720 = vpop.f32.mrf.mxu0
  %v721 = vadd.f32 %v415, %v720
  %v722 = vpop.f32.mrf.mxu0
  %v723 = vadd.f32 %v417, %v722
  %724 = vmatprep.mubr.bf16.mxu0 0
  %725 = vmatmul.mubr.bf16.gmra.mxu0 %v34
  %v726 = vpop.f32.mrf.mxu0
  %v727 = vadd.f32 %v421, %v726
  %v728 = vpop.f32.mrf.mxu0
  %v729 = vadd.f32 %v423, %v728
  %v730 = vpop.f32.mrf.mxu0
  %v731 = vadd.f32 %v425, %v730
  %v732 = vpop.f32.mrf.mxu0
  %v733 = vadd.f32 %v427, %v732
  %734 = vdwg.mxu0
  %v736 = vlaneseq
  %v737 = vshrl.u32 %v736, 7
  %v738 = vsub.s32 0, %v737
  %v739 = vrot.slane %v56, %v738
  %v740 = vlaneseq
  %v741 = vshrl.u32 %v740, 7
  %v742 = vsub.s32 1, %v741
  %v743 = vrot.slane %v56, %v742
  %v744 = vlaneseq
  %v745 = vshrl.u32 %v744, 7
  %v746 = vsub.s32 2, %v745
  %v747 = vrot.slane %v56, %v746
  %v748 = vlaneseq
  %v749 = vshrl.u32 %v748, 7
  %v750 = vsub.s32 3, %v749
  %v751 = vrot.slane %v56, %v750
  %v756 = vadd.f32 %v624, %v739
  %v757 = vadd.f32 %v626, %v743
  %v758 = vadd.f32 %v697, %v747
  %v759 = vadd.f32 %v699, %v751
  %v760 = vadd.f32 %v628, %v739
  %v761 = vadd.f32 %v630, %v743
  %v762 = vadd.f32 %v701, %v747
  %v763 = vadd.f32 %v703, %v751
  %v764 = vadd.f32 %v634, %v739
  %v765 = vadd.f32 %v636, %v743
  %v766 = vadd.f32 %v707, %v747
  %v767 = vadd.f32 %v709, %v751
  %v768 = vadd.f32 %v638, %v739
  %v769 = vadd.f32 %v640, %v743
  %v770 = vadd.f32 %v711, %v747
  %v771 = vadd.f32 %v713, %v751
  %v772 = vadd.f32 %v644, %v739
  %v773 = vadd.f32 %v646, %v743
  %v774 = vadd.f32 %v717, %v747
  %v775 = vadd.f32 %v719, %v751
  %v776 = vadd.f32 %v648, %v739
  %v777 = vadd.f32 %v650, %v743
  %v778 = vadd.f32 %v721, %v747
  %v779 = vadd.f32 %v723, %v751
  %v780 = vadd.f32 %v654, %v739
  %v781 = vadd.f32 %v656, %v743
  %v782 = vadd.f32 %v727, %v747
  %v783 = vadd.f32 %v729, %v751
  %v784 = vadd.f32 %v658, %v739
  %v785 = vadd.f32 %v660, %v743
  %v786 = vadd.f32 %v731, %v747
  %v787 = vadd.f32 %v733, %v751
  %v788 = vxor.u32 %v756, 2147483648
  %v789 = vxor.u32 %v760, 2147483648
  %v790 = vxor.u32 %v764, 2147483648
  %v791 = vxor.u32 %v768, 2147483648
  %v792 = vxor.u32 %v772, 2147483648
  %v793 = vxor.u32 %v776, 2147483648
  %v794 = vxor.u32 %v780, 2147483648
  %v795 = vxor.u32 %v784, 2147483648
  %v796 = vmul.f32 %v788, 1.442695
  %v797 = vpow.pop %v796
  %v798 = vmul.f32 %v789, 1.442695
  %v799 = vpow.pop %v798
  %v800 = vmul.f32 %v790, 1.442695
  %v801 = vpow.pop %v800
  %v802 = vmul.f32 %v791, 1.442695
  %v803 = vpow.pop %v802
  %v804 = vmul.f32 %v792, 1.442695
  %v805 = vpow.pop %v804
  %v806 = vmul.f32 %v793, 1.442695
  %v807 = vpow.pop %v806
  %v808 = vmul.f32 %v794, 1.442695
  %v809 = vpow.pop %v808
  %v810 = vmul.f32 %v795, 1.442695
  %v811 = vpow.pop %v810
  %v812 = vadd.f32 %v797, 1.0
  %v813 = vadd.f32 %v799, 1.0
  %v814 = vadd.f32 %v801, 1.0
  %v815 = vadd.f32 %v803, 1.0
  %v816 = vadd.f32 %v805, 1.0
  %v817 = vadd.f32 %v807, 1.0
  %v818 = vadd.f32 %v809, 1.0
  %v819 = vadd.f32 %v811, 1.0
  %v820 = vrcp.pop %v812
  %v821 = vmul.f32 1.0, %v820
  %v822 = vrcp.pop %v813
  %v823 = vmul.f32 1.0, %v822
  %v824 = vrcp.pop %v814
  %v825 = vmul.f32 1.0, %v824
  %v826 = vrcp.pop %v815
  %v827 = vmul.f32 1.0, %v826
  %v828 = vrcp.pop %v816
  %v829 = vmul.f32 1.0, %v828
  %v830 = vrcp.pop %v817
  %v831 = vmul.f32 1.0, %v830
  %v832 = vrcp.pop %v818
  %v833 = vmul.f32 1.0, %v832
  %v834 = vrcp.pop %v819
  %v835 = vmul.f32 1.0, %v834
  %v836 = vxor.u32 %v757, 2147483648
  %v837 = vxor.u32 %v761, 2147483648
  %v838 = vxor.u32 %v765, 2147483648
  %v839 = vxor.u32 %v769, 2147483648
  %v840 = vxor.u32 %v773, 2147483648
  %v841 = vxor.u32 %v777, 2147483648
  %v842 = vxor.u32 %v781, 2147483648
  %v843 = vxor.u32 %v785, 2147483648
  %v844 = vmul.f32 %v836, 1.442695
  %v845 = vpow.pop %v844
  %v846 = vmul.f32 %v837, 1.442695
  %v847 = vpow.pop %v846
  %v848 = vmul.f32 %v838, 1.442695
  %v849 = vpow.pop %v848
  %v850 = vmul.f32 %v839, 1.442695
  %v851 = vpow.pop %v850
  %v852 = vmul.f32 %v840, 1.442695
  %v853 = vpow.pop %v852
  %v854 = vmul.f32 %v841, 1.442695
  %v855 = vpow.pop %v854
  %v856 = vmul.f32 %v842, 1.442695
  %v857 = vpow.pop %v856
  %v858 = vmul.f32 %v843, 1.442695
  %v859 = vpow.pop %v858
  %v860 = vadd.f32 %v845, 1.0
  %v861 = vadd.f32 %v847, 1.0
  %v862 = vadd.f32 %v849, 1.0
  %v863 = vadd.f32 %v851, 1.0
  %v864 = vadd.f32 %v853, 1.0
  %v865 = vadd.f32 %v855, 1.0
  %v866 = vadd.f32 %v857, 1.0
  %v867 = vadd.f32 %v859, 1.0
  %v868 = vrcp.pop %v860
  %v869 = vmul.f32 1.0, %v868
  %v870 = vrcp.pop %v861
  %v871 = vmul.f32 1.0, %v870
  %v872 = vrcp.pop %v862
  %v873 = vmul.f32 1.0, %v872
  %v874 = vrcp.pop %v863
  %v875 = vmul.f32 1.0, %v874
  %v876 = vrcp.pop %v864
  %v877 = vmul.f32 1.0, %v876
  %v878 = vrcp.pop %v865
  %v879 = vmul.f32 1.0, %v878
  %v880 = vrcp.pop %v866
  %v881 = vmul.f32 1.0, %v880
  %v882 = vrcp.pop %v867
  %v883 = vmul.f32 1.0, %v882
  %v884 = vtanh.pop %v758
  %v885 = vtanh.pop %v762
  %v886 = vtanh.pop %v766
  %v887 = vtanh.pop %v770
  %v888 = vtanh.pop %v774
  %v889 = vtanh.pop %v778
  %v890 = vtanh.pop %v782
  %v891 = vtanh.pop %v786
  %v892 = vxor.u32 %v759, 2147483648
  %v893 = vxor.u32 %v763, 2147483648
  %v894 = vxor.u32 %v767, 2147483648
  %v895 = vxor.u32 %v771, 2147483648
  %v896 = vxor.u32 %v775, 2147483648
  %v897 = vxor.u32 %v779, 2147483648
  %v898 = vxor.u32 %v783, 2147483648
  %v899 = vxor.u32 %v787, 2147483648
  %v900 = vmul.f32 %v892, 1.442695
  %v901 = vpow.pop %v900
  %v902 = vmul.f32 %v893, 1.442695
  %v903 = vpow.pop %v902
  %v904 = vmul.f32 %v894, 1.442695
  %v905 = vpow.pop %v904
  %v906 = vmul.f32 %v895, 1.442695
  %v907 = vpow.pop %v906
  %v908 = vmul.f32 %v896, 1.442695
  %v909 = vpow.pop %v908
  %v910 = vmul.f32 %v897, 1.442695
  %v911 = vpow.pop %v910
  %v912 = vmul.f32 %v898, 1.442695
  %v913 = vpow.pop %v912
  %v914 = vmul.f32 %v899, 1.442695
  %v915 = vpow.pop %v914
  %v916 = vadd.f32 %v901, 1.0
  %v917 = vadd.f32 %v903, 1.0
  %v918 = vadd.f32 %v905, 1.0
  %v919 = vadd.f32 %v907, 1.0
  %v920 = vadd.f32 %v909, 1.0
  %v921 = vadd.f32 %v911, 1.0
  %v922 = vadd.f32 %v913, 1.0
  %v923 = vadd.f32 %v915, 1.0
  %v924 = vrcp.pop %v916
  %v925 = vmul.f32 1.0, %v924
  %v926 = vrcp.pop %v917
  %v927 = vmul.f32 1.0, %v926
  %v928 = vrcp.pop %v918
  %v929 = vmul.f32 1.0, %v928
  %v930 = vrcp.pop %v919
  %v931 = vmul.f32 1.0, %v930
  %v932 = vrcp.pop %v920
  %v933 = vmul.f32 1.0, %v932
  %v934 = vrcp.pop %v921
  %v935 = vmul.f32 1.0, %v934
  %v936 = vrcp.pop %v922
  %v937 = vmul.f32 1.0, %v936
  %v938 = vrcp.pop %v923
  %v939 = vmul.f32 1.0, %v938
  %v940 = vmul.f32 %v869, %v44
  %v941 = vmul.f32 %v871, %v45
  %v942 = vmul.f32 %v873, %v46
  %v943 = vmul.f32 %v875, %v47
  %v944 = vmul.f32 %v877, %v48
  %v945 = vmul.f32 %v879, %v49
  %v946 = vmul.f32 %v881, %v50
  %v947 = vmul.f32 %v883, %v51
  %v948 = vmul.f32 %v821, %v884
  %v949 = vmul.f32 %v823, %v885
  %v950 = vmul.f32 %v825, %v886
  %v951 = vmul.f32 %v827, %v887
  %v952 = vmul.f32 %v829, %v888
  %v953 = vmul.f32 %v831, %v889
  %v954 = vmul.f32 %v833, %v890
  %v955 = vmul.f32 %v835, %v891
  %v956 = vadd.f32 %v940, %v948
  %v957 = vadd.f32 %v941, %v949
  %v958 = vadd.f32 %v942, %v950
  %v959 = vadd.f32 %v943, %v951
  %v960 = vadd.f32 %v944, %v952
  %v961 = vadd.f32 %v945, %v953
  %v962 = vadd.f32 %v946, %v954
  %v963 = vadd.f32 %v947, %v955
  %v964 = vtanh.pop %v956
  %v965 = vtanh.pop %v957
  %v966 = vtanh.pop %v958
  %v967 = vtanh.pop %v959
  %v968 = vtanh.pop %v960
  %v969 = vtanh.pop %v961
  %v970 = vtanh.pop %v962
  %v971 = vtanh.pop %v963
  %v972 = vmul.f32 %v925, %v964
  %v973 = vmul.f32 %v927, %v965
  %v974 = vmul.f32 %v929, %v966
  %v975 = vmul.f32 %v931, %v967
  %v976 = vmul.f32 %v933, %v968
  %v977 = vmul.f32 %v935, %v969
  %v978 = vmul.f32 %v937, %v970
  %v979 = vmul.f32 %v939, %v971
  %v980 = vpack.c.bf16 %v973, %v972
  %v981 = vpack.c.bf16 %v975, %v974
  %v982 = vpack.c.bf16 %v977, %v976
  %v983 = vpack.c.bf16 %v979, %v978
  %v984 = vld [vmem:[%s3] sm:$0xf]
  %v985 = vld [vmem:[%s3 + $0x4] sm:$0xf]
  %v986 = vld [vmem:[%s3 + $0x8] sm:$0xf]
  %v987 = vld [vmem:[%s3 + $0xc] sm:$0xf]
  %v988 = vld [vmem:[%s3 + $0x10] sm:$0xf]
  %v989 = vld [vmem:[%s3 + $0x14] sm:$0xf]
  %v990 = vld [vmem:[%s3 + $0x18] sm:$0xf]
  %v991 = vld [vmem:[%s3 + $0x1c] sm:$0xf]
  %v992 = vld [vmem:[%s3 + $0x20] sm:$0xf]
  %v993 = vld [vmem:[%s3 + $0x24] sm:$0xf]
  %v994 = vld [vmem:[%s3 + $0x28] sm:$0xf]
  %v995 = vld [vmem:[%s3 + $0x2c] sm:$0xf]
  %v996 = vld [vmem:[%s3 + $0x30] sm:$0xf]
  %v997 = vld [vmem:[%s3 + $0x34] sm:$0xf]
  %v998 = vld [vmem:[%s3 + $0x38] sm:$0xf]
  %v999 = vld [vmem:[%s3 + $0x3c] sm:$0xf]
  %v1001 = vlaneseq
  %v1002 = vshrl.u32 %v1001, 7
  %v1003 = vsub.s32 0, %v1002
  %v1004 = vrot.slane %v57, %v1003
  %v1022 = vunpack.c.l.b16 %v984
  %v1023 = vunpack.c.l.b16 %v985
  %v1024 = vunpack.c.l.b16 %v986
  %v1025 = vunpack.c.l.b16 %v987
  %v1026 = vunpack.c.l.b16 %v988
  %v1027 = vunpack.c.l.b16 %v989
  %v1028 = vunpack.c.l.b16 %v990
  %v1029 = vunpack.c.l.b16 %v991
  %v1030 = vunpack.c.l.b16 %v992
  %v1031 = vunpack.c.l.b16 %v993
  %v1032 = vunpack.c.l.b16 %v994
  %v1033 = vunpack.c.l.b16 %v995
  %v1034 = vunpack.c.l.b16 %v996
  %v1035 = vunpack.c.l.b16 %v997
  %v1036 = vunpack.c.l.b16 %v998
  %v1037 = vunpack.c.l.b16 %v999
  %v1038 = vpack.c.b16 %v1023, %v1022
  %v1039 = vpack.c.b16 %v1025, %v1024
  %v1040 = vpack.c.b16 %v1027, %v1026
  %v1041 = vpack.c.b16 %v1029, %v1028
  %v1042 = vpack.c.b16 %v1031, %v1030
  %v1043 = vpack.c.b16 %v1033, %v1032
  %v1044 = vpack.c.b16 %v1035, %v1034
  %v1045 = vpack.c.b16 %v1037, %v1036
  %1054 = vmatprep.subr.bf16.mxu0 0
  %1055 = vmatpush1.bf16.msra.mxu0 %v1045
  %1056 = vmatprep.subr.bf16.mxu0 0
  %1057 = vmatpush1.bf16.msra.mxu0 %v1044
  %1058 = vmatprep.subr.bf16.mxu0 0
  %1059 = vmatpush1.bf16.msra.mxu0 %v1043
  %1060 = vmatprep.subr.bf16.mxu0 0
  %1061 = vmatpush1.bf16.msra.mxu0 %v1042
  %1062 = vmatprep.subr.bf16.mxu0 0
  %1063 = vmatpush1.bf16.msra.mxu0 %v1041
  %1064 = vmatprep.subr.bf16.mxu0 0
  %1065 = vmatpush1.bf16.msra.mxu0 %v1040
  %1066 = vmatprep.subr.bf16.mxu0 0
  %1067 = vmatpush1.bf16.msra.mxu0 %v1039
  %1068 = vmatprep.subr.bf16.mxu0 0
  %1069 = vmatpush1.bf16.msra.mxu0 %v1038
  %1070 = vmatprep.subr.bf16.mxu0 0
  %1071 = vmatpush2.bf16.msra.mxu0 0
  %1072 = vmatprep.subr.bf16.mxu0 0
  %1073 = vmatpush2.bf16.msra.mxu0 0
  %1074 = vmatprep.subr.bf16.mxu0 0
  %1075 = vmatpush2.bf16.msra.mxu0 0
  %1076 = vmatprep.subr.bf16.mxu0 0
  %1077 = vmatpush2.bf16.msra.mxu0 0
  %1078 = vmatprep.subr.bf16.mxu0 0
  %1079 = vmatpush2.bf16.msra.mxu0 0
  %1080 = vmatprep.subr.bf16.mxu0 0
  %1081 = vmatpush2.bf16.msra.mxu0 0
  %1082 = vmatprep.subr.bf16.mxu0 0
  %1083 = vmatpush2.bf16.msra.mxu0 0
  %1084 = vmatprep.subr.bf16.mxu0 0
  %1085 = vmatpush2.bf16.msra.mxu0 0
  %1086 = vmatprep.mubr.bf16.mxu0 0
  %1087 = vmatmul.mubr.bf16.gmra.mxu0 %v980
  %v1088 = vpop.f32.mrf.mxu0
  %v1089 = vadd.f32 %v1004, %v1088
  %v1090 = vpop.f32.mrf.mxu0
  %v1091 = vpop.f32.mrf.mxu0
  %v1092 = vadd.f32 %v1004, %v1091
  %v1093 = vpop.f32.mrf.mxu0
  %1094 = vmatprep.mubr.bf16.mxu0 0
  %1095 = vmatmul.mubr.bf16.gmra.mxu0 %v981
  %v1096 = vpop.f32.mrf.mxu0
  %v1097 = vadd.f32 %v1004, %v1096
  %v1098 = vpop.f32.mrf.mxu0
  %v1099 = vpop.f32.mrf.mxu0
  %v1100 = vadd.f32 %v1004, %v1099
  %v1101 = vpop.f32.mrf.mxu0
  %1102 = vmatprep.mubr.bf16.mxu0 0
  %1103 = vmatmul.mubr.bf16.gmra.mxu0 %v982
  %v1104 = vpop.f32.mrf.mxu0
  %v1105 = vadd.f32 %v1004, %v1104
  %v1106 = vpop.f32.mrf.mxu0
  %v1107 = vpop.f32.mrf.mxu0
  %v1108 = vadd.f32 %v1004, %v1107
  %v1109 = vpop.f32.mrf.mxu0
  %1110 = vmatprep.mubr.bf16.mxu0 0
  %1111 = vmatmul.mubr.bf16.gmra.mxu0 %v983
  %v1112 = vpop.f32.mrf.mxu0
  %v1113 = vadd.f32 %v1004, %v1112
  %v1114 = vpop.f32.mrf.mxu0
  %v1115 = vpop.f32.mrf.mxu0
  %v1116 = vadd.f32 %v1004, %v1115
  %v1117 = vpop.f32.mrf.mxu0
  %1118 = vdwg.mxu0
  %v1119 = vmax.f32 %v1089, %v1105
  %v1120 = vmax.f32 %v1092, %v1108
  %v1121 = vmax.f32 %v1097, %v1113
  %v1122 = vmax.f32 %v1100, %v1116
  %v1123 = vmax.f32 %v1119, %v1120
  %v1124 = vmax.f32 %v1121, %v1122
  %v1125 = vmax.f32 %v1123, %v1124
  %v1126 = vrot.slane %v1125, 4
  %v1127 = vmax.f32 %v1125, %v1126
  %v1128 = vrot.slane %v1127, 2
  %v1129 = vmax.f32 %v1127, %v1128
  %v1130 = vrot.slane %v1129, 1
  %v1131 = vmax.f32 %v1129, %v1130
  %v1132 = vsub.f32 %v1089, %v1131
  %v1133 = vsub.f32 %v1092, %v1131
  %v1134 = vsub.f32 %v1097, %v1131
  %v1135 = vsub.f32 %v1100, %v1131
  %v1136 = vsub.f32 %v1105, %v1131
  %v1137 = vsub.f32 %v1108, %v1131
  %v1138 = vsub.f32 %v1113, %v1131
  %v1139 = vsub.f32 %v1116, %v1131
  %v1140 = vmul.f32 %v1132, 1.442695
  %v1141 = vpow.pop %v1140
  %v1142 = vmul.f32 %v1133, 1.442695
  %v1143 = vpow.pop %v1142
  %v1144 = vmul.f32 %v1134, 1.442695
  %v1145 = vpow.pop %v1144
  %v1146 = vmul.f32 %v1135, 1.442695
  %v1147 = vpow.pop %v1146
  %v1148 = vmul.f32 %v1136, 1.442695
  %v1149 = vpow.pop %v1148
  %v1150 = vmul.f32 %v1137, 1.442695
  %v1151 = vpow.pop %v1150
  %v1152 = vmul.f32 %v1138, 1.442695
  %v1153 = vpow.pop %v1152
  %v1154 = vmul.f32 %v1139, 1.442695
  %v1155 = vpow.pop %v1154
  %v1156 = vadd.f32 %v1141, %v1143
  %v1157 = vadd.f32 %v1156, %v1145
  %v1158 = vadd.f32 %v1157, %v1147
  %v1159 = vadd.f32 %v1158, %v1149
  %v1160 = vadd.f32 %v1159, %v1151
  %v1161 = vadd.f32 %v1160, %v1153
  %v1162 = vadd.f32 %v1161, %v1155
  %v1163 = vrot.slane %v1162, 4
  %v1164 = vadd.f32 %v1162, %v1163
  %v1165 = vrot.slane %v1164, 2
  %v1166 = vadd.f32 %v1164, %v1165
  %v1167 = vrot.slane %v1166, 1
  %v1168 = vadd.f32 %v1166, %v1167
  %v1169 = vlog2.pop %v1168
  %v1170 = vmul.f32 %v1169, 0.6931472
  %v1171 = vsub.f32 %v1132, %v1170
  %v1172 = vsub.f32 %v1133, %v1170
  %v1173 = vsub.f32 %v1134, %v1170
  %v1174 = vsub.f32 %v1135, %v1170
  %v1175 = vsub.f32 %v1136, %v1170
  %v1176 = vsub.f32 %v1137, %v1170
  %v1177 = vsub.f32 %v1138, %v1170
  %v1178 = vsub.f32 %v1139, %v1170
  %1179 = vst [vmem:[%s5] sm:$0xff] %v1171
  %1180 = vst [vmem:[%s5 + $0x8] sm:$0xff] %v1172
  %1181 = vst [vmem:[%s5 + $0x10] sm:$0xff] %v1173
  %1182 = vst [vmem:[%s5 + $0x18] sm:$0xff] %v1174
  %1183 = vst [vmem:[%s5 + $0x20] sm:$0xff] %v1175
  %1184 = vst [vmem:[%s5 + $0x28] sm:$0xff] %v1176
  %1185 = vst [vmem:[%s5 + $0x30] sm:$0xff] %v1177
  %1186 = vst [vmem:[%s5 + $0x38] sm:$0xff] %v1178
  %1187 = vst [vmem:[%s6] sm:$0xff] %v972
  %1188 = vst [vmem:[%s6 + $0x8] sm:$0xff] %v973
  %1189 = vst [vmem:[%s6 + $0x10] sm:$0xff] %v974
  %1190 = vst [vmem:[%s6 + $0x18] sm:$0xff] %v975
  %1191 = vst [vmem:[%s6 + $0x20] sm:$0xff] %v976
  %1192 = vst [vmem:[%s6 + $0x28] sm:$0xff] %v977
  %1193 = vst [vmem:[%s6 + $0x30] sm:$0xff] %v978
  %1194 = vst [vmem:[%s6 + $0x38] sm:$0xff] %v979
  %s1195 = scalar_lea.vmem %s6, 64
  %1196 = vst [vmem:[%s1195] sm:$0xff] %v956
  %1197 = vst [vmem:[%s1195 + $0x8] sm:$0xff] %v957
  %1198 = vst [vmem:[%s1195 + $0x10] sm:$0xff] %v958
  %1199 = vst [vmem:[%s1195 + $0x18] sm:$0xff] %v959
  %1200 = vst [vmem:[%s1195 + $0x20] sm:$0xff] %v960
  %1201 = vst [vmem:[%s1195 + $0x28] sm:$0xff] %v961
  %1202 = vst [vmem:[%s1195 + $0x30] sm:$0xff] %v962
  %1203 = vst [vmem:[%s1195 + $0x38] sm:$0xff] %v963
  // Predicated region
  $region22: #{rnn_forward.1} parent=0 // pred_check
    _
  $region23: #{rnn_forward.1} parent=0 // pred_check_branch
    %1205 = sbr.rel (0) target = $region25
  $region24: #{rnn_forward.1} parent=0 // pred_region
    _
  $region25: #{rnn_forward.1} parent=0 // pred_fallthru
    _
  // Predicated region
  $region26: #{rnn_forward.1} parent=0 // pred_check
    _
  $region27: #{rnn_forward.1} parent=0 // pred_check_branch
    %1207 = sbr.rel (0) target = $region29
  $region28: #{rnn_forward.1} parent=0 // pred_region
    _
  $region29: #{rnn_forward.1} parent=0 // pred_fallthru
    _
  // Predicated region
  $region30: #{rnn_forward.1} parent=0 // pred_check
    _
  $region31: #{rnn_forward.1} parent=0 // pred_check_branch
    %1209 = sbr.rel (0) target = $region33
  $region32: #{rnn_forward.1} parent=0 // pred_region
    _
  $region33: #{rnn_forward.1} parent=0 // pred_fallthru
    _
  // Predicated region
  $region34: #{rnn_forward.1} parent=0 // pred_check
    _
  $region35: #{rnn_forward.1} parent=0 // pred_check_branch
    %1211 = sbr.rel (0) target = $region37
  $region36: #{rnn_forward.1} parent=0 // pred_region
    _
  $region37: #{rnn_forward.1} parent=0 // pred_fallthru
    _

</llo_original>
